<compile_context>
chip_gen: v7x
topology: tpu7x:2x2x1
jax: 0.10.0
libtpu: 0.0.40
codegen_flags: <defaults>
</compile_context>

<pallas_src>
import jax
import jax.numpy as jnp
from jax.experimental import pallas as pl
from jax.experimental.pallas import tpu as pltpu


def linear_add_kernel(x_ref, w_ref, b_ref, v2_ref, o_ref):
    # x_ref: (TB, K), w_ref: (K, N) pre-transposed -> canonical MXU dot.
    acc = jnp.dot(x_ref[...], w_ref[...], preferred_element_type=jnp.float32)
    o_ref[...] = (acc + b_ref[...] + v2_ref[...]).astype(o_ref.dtype)


def _round_up(x, m):
    return ((x + m - 1) // m) * m


def linear_add(v1, v2, weight, bias, *, block_b=2048, donate_v2=False,
               lane_pack=None):
    """Computes v1 @ weight.T + bias + v2 in a single Pallas kernel.

    v1:     (B, 128) float32
    v2:     (B, 64)  float32
    weight: (64, 128) float32  (PyTorch nn.Linear layout)
    bias:   (64,)    float32

    donate_v2: alias v2's HBM buffer to the output (caller must not read v2
               afterwards).
    lane_pack: pack pairs of batch rows so the output is 128 lanes wide
               (unmasked stores, denser DMAs).  None -> auto (large B only).
    """
    B, K = v1.shape
    N, K2 = weight.shape
    assert K == K2, f"in_features mismatch: {K} vs {K2}"
    assert v2.shape == (B, N)
    assert bias.shape == (N,)

    # One-time 32 KB transpose so the kernel's RHS is already (K, N).
    w_t = jnp.asarray(weight).T

    if lane_pack is None:
        lane_pack = (N < 128) and (B % 2 == 0) and (B >= 1024)

    if lane_pack:
        assert B % 2 == 0, "lane_pack requires an even batch"
        # Pack pairs of rows: v1 -> (B/2, 2K), v2/out -> (B/2, 2N); the weight
        # becomes a 2Kx2N block-diagonal so [x0|x1] @ W_blk = [x0@Wt | x1@Wt].
        # Reshapes are zero-copy in HBM; output last dim becomes 128 lanes.
        x = v1.reshape(B // 2, 2 * K)
        res = v2.reshape(B // 2, 2 * N)
        zeros = jnp.zeros_like(w_t)
        w_in = jnp.block([[w_t, zeros], [zeros, w_t]])        # (2K, 2N)
        b_in = jnp.concatenate([bias, bias]).reshape(1, 2 * N)
        M, Kin, Nout = B // 2, 2 * K, 2 * N
    else:
        x, res, w_in = v1, v2, w_t
        b_in = bias.reshape(1, N)
        M, Kin, Nout = B, K, N

    # Batch tile: large enough to amortize the ~0.35us/step pipeline overhead,
    # capped at block_b (<=2048 fits v5e's 16 MiB scoped-VMEM default), and
    # chosen so the grid has >=2 steps when possible (v7x megacore sharding).
    block_b = max(8, _round_up(block_b, 8))
    TB = min(block_b, max(8, _round_up(pl.cdiv(M, 2), 8)))
    TB = min(TB, _round_up(M, 8))
    grid = (pl.cdiv(M, TB),)

    flops = 2 * M * Kin * Nout
    bytes_accessed = 4 * (M * Kin + Kin * Nout + Nout + 2 * M * Nout)

    out = pl.pallas_call(
        linear_add_kernel,
        out_shape=jax.ShapeDtypeStruct((M, Nout), v1.dtype),
        grid=grid,
        in_specs=[
            pl.BlockSpec((TB, Kin), lambda i: (i, 0)),    # activations: streamed
            pl.BlockSpec((Kin, Nout), lambda i: (0, 0)),  # weight: VMEM-resident
            pl.BlockSpec((1, Nout), lambda i: (0, 0)),    # bias:   VMEM-resident
            pl.BlockSpec((TB, Nout), lambda i: (i, 0)),   # residual: streamed
        ],
        out_specs=pl.BlockSpec((TB, Nout), lambda i: (i, 0)),
        input_output_aliases=({3: 0} if donate_v2 else {}),
        compiler_params=pltpu.CompilerParams(
            dimension_semantics=("parallel",),
        ),
        cost_estimate=pl.CostEstimate(
            flops=flops, bytes_accessed=bytes_accessed, transcendentals=0,
        ),
    )(x, w_in, b_in, res)

    if lane_pack:
        out = out.reshape(B, N)
    return out


if __name__ == "__main__":
    key = jax.random.PRNGKey(0)
    k1, k2, k3, k4 = jax.random.split(key, 4)

    B, IN, OUT = 8, 128, 64
    v1 = jax.random.normal(k1, (B, IN), dtype=jnp.float32)
    v2 = jax.random.normal(k2, (B, OUT), dtype=jnp.float32)

    # Deterministic parameter init (matches nn.Linear(128, 64) shapes).
    bound = 1.0 / (IN ** 0.5)
    weight = jax.random.uniform(k3, (OUT, IN), minval=-bound, maxval=bound,
                                dtype=jnp.float32)
    bias = jax.random.uniform(k4, (OUT,), minval=-bound, maxval=bound,
                              dtype=jnp.float32)

    # --- Demo shape (module spec): no donation, single grid step. ---
    ref = v1 @ weight.T + bias + v2
    out = linear_add(v1, v2, weight, bias)
    jax.block_until_ready(out)
    assert jnp.allclose(out, ref, atol=1e-5, rtol=1e-5), "mismatch (B=8)"

    # --- Multi-step grid + partial tail block + lane packing + donated v2. ---
    B2 = 40
    v1b = jax.random.normal(k1, (B2, IN), dtype=jnp.float32)
    v2b = jax.random.normal(k2, (B2, OUT), dtype=jnp.float32)
    refb = v1b @ weight.T + bias + v2b          # computed BEFORE donation
    outb = linear_add(v1b, v2b, weight, bias, block_b=16,
                      donate_v2=True, lane_pack=True)
    jax.block_until_ready(outb)
    assert jnp.allclose(outb, refb, atol=1e-5, rtol=1e-5), "mismatch (B=40)"

    print("KERNEL_OK")
</pallas_src>

<mosaic_0001>
module attributes {stable_mosaic.version = 11 : i64} {
  func.func @linear_add_kernel(%arg0: i32, %arg1: memref<8x128xf32, #tpu.memory_space<vmem>>, %arg2: memref<128x64xf32, #tpu.memory_space<vmem>>, %arg3: memref<1x64xf32, #tpu.memory_space<vmem>>, %arg4: memref<8x64xf32, #tpu.memory_space<vmem>>, %arg5: memref<8x64xf32, #tpu.memory_space<vmem>>) attributes {dimension_semantics = [#tpu.dimension_semantics<parallel>], iteration_bounds = array<i64: 1>, scalar_prefetch = 0 : i64, scratch_operands = 0 : i64, tpu.core_type = #tpu.core_type<tc>, window_params = [{transform_indices = @transform_0, window_bounds = array<i64: 8, 128>}, {pipeline_mode = #tpu.pipeline_mode<synchronous>, transform_indices = @transform_1, window_bounds = array<i64: 128, 64>}, {pipeline_mode = #tpu.pipeline_mode<synchronous>, transform_indices = @transform_2, window_bounds = array<i64: 1, 64>}, {transform_indices = @transform_3, window_bounds = array<i64: 8, 64>}, {transform_indices = @transform_4, window_bounds = array<i64: 8, 64>}]} {
    %c0 = arith.constant 0 : index
    %c0_0 = arith.constant 0 : index
    %0 = vector.load %arg1[%c0, %c0_0] : memref<8x128xf32, #tpu.memory_space<vmem>>, vector<8x128xf32>
    %c0_1 = arith.constant 0 : index
    %c0_2 = arith.constant 0 : index
    %1 = vector.load %arg2[%c0_1, %c0_2] : memref<128x64xf32, #tpu.memory_space<vmem>>, vector<128x64xf32>
    %cst = arith.constant dense<0.000000e+00> : vector<8x64xf32>
    %2 = tpu.matmul %0, %1, %cst {dimension_numbers = #tpu.dot_dimension_numbers<[1], [0], [0], [1], [0, 0, 1, 1], [], []>} : vector<8x128xf32>, vector<128x64xf32>, vector<8x64xf32> -> vector<8x64xf32>
    %c0_3 = arith.constant 0 : index
    %c0_4 = arith.constant 0 : index
    %3 = vector.load %arg3[%c0_3, %c0_4] : memref<1x64xf32, #tpu.memory_space<vmem>>, vector<1x64xf32>
    %4 = vector.broadcast %3 : vector<1x64xf32> to vector<8x64xf32>
    %5 = arith.addf %2, %4 : vector<8x64xf32>
    %c0_5 = arith.constant 0 : index
    %c0_6 = arith.constant 0 : index
    %6 = vector.load %arg4[%c0_5, %c0_6] : memref<8x64xf32, #tpu.memory_space<vmem>>, vector<8x64xf32>
    %7 = arith.addf %5, %6 : vector<8x64xf32>
    %c0_7 = arith.constant 0 : index
    %c0_8 = arith.constant 0 : index
    %8 = vector.load %arg5[%c0_7, %c0_8] : memref<8x64xf32, #tpu.memory_space<vmem>>, vector<8x64xf32>
    tpu.vector_store %arg5[%c0_7, %c0_8], %7 {strides = array<i32>} : memref<8x64xf32, #tpu.memory_space<vmem>>, vector<8x64xf32>,
    return
  }
  func.func @transform_0(%arg0: i32) -> (i32, i32) {
    %c0_i32 = arith.constant 0 : i32
    %c0_i32_0 = arith.constant 0 : i32
    return %arg0, %c0_i32 : i32, i32
  }
  func.func @transform_1(%arg0: i32) -> (i32, i32) {
    %c0_i32 = arith.constant 0 : i32
    %c0_i32_0 = arith.constant 0 : i32
    %c0_i32_1 = arith.constant 0 : i32
    return %c0_i32, %c0_i32_0 : i32, i32
  }
  func.func @transform_2(%arg0: i32) -> (i32, i32) {
    %c0_i32 = arith.constant 0 : i32
    %c0_i32_0 = arith.constant 0 : i32
    %c0_i32_1 = arith.constant 0 : i32
    return %c0_i32, %c0_i32_0 : i32, i32
  }
  func.func @transform_3(%arg0: i32) -> (i32, i32) {
    %c0_i32 = arith.constant 0 : i32
    %c0_i32_0 = arith.constant 0 : i32
    return %arg0, %c0_i32 : i32, i32
  }
  func.func @transform_4(%arg0: i32) -> (i32, i32) {
    %c0_i32 = arith.constant 0 : i32
    %c0_i32_0 = arith.constant 0 : i32
    return %arg0, %c0_i32 : i32, i32
  }
}

</mosaic_0001>

<llo_original>
// kernel: tpu_custom_call.1
$region0: #{tpu_custom_call.1}
  #allocation0 [shape = 'u32[]', space=smem, size = 0x4, offset = 0x4, fixed_abs, tag = 'smem constant byte address 0x4 - core index']
  #allocation1 [shape = 'u32[144,128]{1,0:T(1,128)}', space=vmem, size = 0x12000, scoped, tag = 'internal scratch']
  %s0 = inlined_call_operand.vmem [shape: f32[8,128], index: 0, kind: input, shape index: {}]
  %s1 = inlined_call_operand.vmem [shape: f32[128,64], index: 1, kind: input, shape index: {}]
  %s2 = inlined_call_operand.vmem [shape: f32[1,64], index: 2, kind: input, shape index: {}]
  %s3 = inlined_call_operand.vmem [shape: f32[8,64], index: 3, kind: input, shape index: {}]
  %s4 = inlined_call_operand.hbm [shape: f32[8,64], index: 4, kind: output, shape index: {}]
  %s5 = sld [smem:[#allocation0]]
  $region26: #{tpu_custom_call.1} parent=0
    _
  %s7 = ssub.s32 1, %s5
  %s8 = scalar_select 0, %s7, %s5
  $region1: #{tpu_custom_call.1} parent=0
    #allocation2 [shape = 'u8[4096]{0}', space=vmem, size = 0x1000, scoped, tag = 'output window, operand 0, single buffered']
    #allocation3 [shape = 's32[1]{0}', space=sflag, size = 0x4, scoped, tag = 'scoped memory for tpu_custom_call.1']
    %9 = vsyncpa [#allocation3], 0
    // Predicated region
    $region2: #{tpu_custom_call.1} parent=1 // pred_check
      _
    $region3: #{tpu_custom_call.1} parent=1 // pred_check_branch
      %11 = sbr.rel (0) target = $region5
    $region4: #{tpu_custom_call.1} parent=1 // pred_region
      _
    $region5: #{tpu_custom_call.1} parent=1 // pred_fallthru
      _
    // Predicated region
    $region6: #{tpu_custom_call.1} parent=1 // pred_check
      _
    $region7: #{tpu_custom_call.1} parent=1 // pred_check_branch
      %13 = sbr.rel (0) target = $region9
    $region8: #{tpu_custom_call.1} parent=1 // pred_region
      _
    $region9: #{tpu_custom_call.1} parent=1 // pred_fallthru
      _
    // Predicated region
    $region10: #{tpu_custom_call.1} parent=1 // pred_check
      _
    $region11: #{tpu_custom_call.1} parent=1 // pred_check_branch
      %15 = sbr.rel (0) target = $region13
    $region12: #{tpu_custom_call.1} parent=1 // pred_region
      _
    $region13: #{tpu_custom_call.1} parent=1 // pred_fallthru
      _
    // Predicated region
    $region14: #{tpu_custom_call.1} parent=1 // pred_check
      _
    $region15: #{tpu_custom_call.1} parent=1 // pred_check_branch
      %17 = sbr.rel (0) target = $region17
    $region16: #{tpu_custom_call.1} parent=1 // pred_region
      _
    $region17: #{tpu_custom_call.1} parent=1 // pred_fallthru
      _
    %v18 = vld [vmem:[%s0] sm:$0xff]
    %v19 = vld [vmem:[%s1] sm:$0xff]
    %v20 = vld [vmem:[%s1 + $0x8] sm:$0xff]
    %v21 = vld [vmem:[%s1 + $0x10] sm:$0xff]
    %v22 = vld [vmem:[%s1 + $0x18] sm:$0xff]
    %v23 = vld [vmem:[%s1 + $0x20] sm:$0xff]
    %v24 = vld [vmem:[%s1 + $0x28] sm:$0xff]
    %v25 = vld [vmem:[%s1 + $0x30] sm:$0xff]
    %v26 = vld [vmem:[%s1 + $0x38] sm:$0xff]
    %v27 = vld [vmem:[%s1 + $0x40] sm:$0xff]
    %v28 = vld [vmem:[%s1 + $0x48] sm:$0xff]
    %v29 = vld [vmem:[%s1 + $0x50] sm:$0xff]
    %v30 = vld [vmem:[%s1 + $0x58] sm:$0xff]
    %v31 = vld [vmem:[%s1 + $0x60] sm:$0xff]
    %v32 = vld [vmem:[%s1 + $0x68] sm:$0xff]
    %v33 = vld [vmem:[%s1 + $0x70] sm:$0xff]
    %v34 = vld [vmem:[%s1 + $0x78] sm:$0xff]
    %v35 = vld [vmem:[%s2] sm:$0x1]
    %v37 = vlaneseq
    %v38 = vshrl.u32 %v37, 7
    %v39 = vsub.s32 0, %v38
    %v40 = vrot.slane %v35, %v39
    %42 = vmatprep.subr.mxu0 0.0
    %43 = vmatpush1.msra.mxu0 %v19
    %44 = vmatprep.subr.mxu0 0.0
    %45 = vmatpush1.msra.mxu0 %v20
    %46 = vmatprep.subr.mxu0 0.0
    %47 = vmatpush1.msra.mxu0 %v21
    %48 = vmatprep.subr.mxu0 0.0
    %49 = vmatpush1.msra.mxu0 %v22
    %50 = vmatprep.subr.mxu0 0.0
    %51 = vmatpush1.msra.mxu0 %v23
    %52 = vmatprep.subr.mxu0 0.0
    %53 = vmatpush1.msra.mxu0 %v24
    %54 = vmatprep.subr.mxu0 0.0
    %55 = vmatpush1.msra.mxu0 %v25
    %56 = vmatprep.subr.mxu0 0.0
    %57 = vmatpush1.msra.mxu0 %v26
    %58 = vmatprep.subr.mxu0 0.0
    %59 = vmatpush1.msra.mxu0 %v27
    %60 = vmatprep.subr.mxu0 0.0
    %61 = vmatpush1.msra.mxu0 %v28
    %62 = vmatprep.subr.mxu0 0.0
    %63 = vmatpush1.msra.mxu0 %v29
    %64 = vmatprep.subr.mxu0 0.0
    %65 = vmatpush1.msra.mxu0 %v30
    %66 = vmatprep.subr.mxu0 0.0
    %67 = vmatpush1.msra.mxu0 %v31
    %68 = vmatprep.subr.mxu0 0.0
    %69 = vmatpush1.msra.mxu0 %v32
    %70 = vmatprep.subr.mxu0 0.0
    %71 = vmatpush1.msra.mxu0 %v33
    %72 = vmatprep.subr.mxu0 0.0
    %73 = vmatpush1.msra.mxu0 %v34
    %74 = vmatprep.subr.mxu0 0.0
    %75 = vmatpush1.msra.mxu0 0.0
    %76 = vmatprep.subr.mxu0 0.0
    %77 = vmatpush1.msra.mxu0 0.0
    %78 = vmatprep.subr.mxu0 0.0
    %79 = vmatpush1.msra.mxu0 0.0
    %80 = vmatprep.subr.mxu0 0.0
    %81 = vmatpush1.msra.mxu0 0.0
    %82 = vmatprep.subr.mxu0 0.0
    %83 = vmatpush1.msra.mxu0 0.0
    %84 = vmatprep.subr.mxu0 0.0
    %85 = vmatpush1.msra.mxu0 0.0
    %86 = vmatprep.subr.mxu0 0.0
    %87 = vmatpush1.msra.mxu0 0.0
    %88 = vmatprep.subr.mxu0 0.0
    %89 = vmatpush1.msra.mxu0 0.0
    %90 = vmatprep.subr.mxu0 0.0
    %91 = vmatpush1.msra.mxu0 0.0
    %92 = vmatprep.subr.mxu0 0.0
    %93 = vmatpush1.msra.mxu0 0.0
    %94 = vmatprep.subr.mxu0 0.0
    %95 = vmatpush1.msra.mxu0 0.0
    %96 = vmatprep.subr.mxu0 0.0
    %97 = vmatpush1.msra.mxu0 0.0
    %98 = vmatprep.subr.mxu0 0.0
    %99 = vmatpush1.msra.mxu0 0.0
    %100 = vmatprep.subr.mxu0 0.0
    %101 = vmatpush1.msra.mxu0 0.0
    %102 = vmatprep.subr.mxu0 0.0
    %103 = vmatpush1.msra.mxu0 0.0
    %104 = vmatprep.subr.mxu0 0.0
    %105 = vmatpush1.msra.mxu0 0.0
    %106 = vmatprep.mubr.f32.mxu0 0.0
    %107 = vmatmul.mubr.f32.gmra.mrb[0].mxu0 %v18
    %v108 = vpop.f32.mrb[0].mxu0
    %v109 = vadd.f32 %v40, %v108
    %v110 = vpop.f32.mrb[0].mxu0
    %111 = vdwg.mxu0
    %v112 = vld [vmem:[%s3] sm:$0xff]
    %v113 = vadd.f32 %v109, %v112
    %vm114 = vcmask 523264
    %115 = vst.msk [vmem:[#allocation2] sm:$0xff] %vm114, %v113
    // Predicated region
    $region18: #{tpu_custom_call.1} parent=1 // pred_check
      _
    $region19: #{tpu_custom_call.1} parent=1 // pred_check_branch
      %117 = sbr.rel (0) target = $region21
    $region20: #{tpu_custom_call.1} parent=1 // pred_region
      %s119 = ssub.s32 128, 128
      %120 = vsyncadd [#allocation3], %s119
      %s122 = sshll.u32 [#allocation2], 4
      %s123 = int_to_ptr.vmem [resolvable:$true] %s122
      %125 = dma.vmem_to_hbm [thread:$0]  %s123, 128, %s4, [#allocation3]
    $region21: #{tpu_custom_call.1} parent=1 // pred_fallthru
      _
    // Predicated region
    $region22: #{tpu_custom_call.1} parent=1 // pred_check
      _
    $region23: #{tpu_custom_call.1} parent=1 // pred_check_branch
      %127 = sbr.rel (0) target = $region25
    $region24: #{tpu_custom_call.1} parent=1 // pred_region
      %128 = dma.done [#allocation3], 128
    $region25: #{tpu_custom_call.1} parent=1 // pred_fallthru
      _
    %129 = vsyncpa [#allocation3], 1

</llo_original>
